<compile_context>
chip_gen: v7x
topology: tpu7x:2x2x1
jax: 0.10.0
libtpu: 0.0.40
codegen_flags: <defaults>
</compile_context>

<pallas_src>
import jax
import jax.numpy as jnp
from jax.experimental import pallas as pl
from jax.experimental.pallas import tpu as pltpu


def _make_smoothness_kernel(C, TH, W, real_h, n_h, inv_count, padded):
    def kernel(img_ref, val_ref, out_ref, acc_ref, carry_img_ref, carry_val_ref):
        h = pl.program_id(1)

        @pl.when(h == 0)
        def _init():
            acc_ref[...] = jnp.zeros_like(acc_ref)

        # Halo: y-gradient between the previous tile's last row and this tile's
        # first row. Both rows are always real rows, even when H is padded.
        @pl.when(h > 0)
        def _halo():
            img_top = img_ref[0, :, 0, :].astype(jnp.float32)        # (C, W)
            val_top = val_ref[0, :, 0, :].astype(jnp.float32)        # (1, W)
            sy_b = jnp.sum(jnp.abs(carry_img_ref[...] - img_top),
                           axis=0, keepdims=True)                    # (1, W)
            wy_b = jnp.exp(-jnp.abs(carry_val_ref[...] - val_top))   # (1, W)
            acc_ref[0:1, :] = acc_ref[0:1, :] + wy_b * sy_b

        # Channel-summed |forward difference| via XLU rolls (wrap masked below).
        sx = None
        sy = None
        for c in range(C):
            ch = img_ref[0, c]                                        # (TH, W), native dtype
            dxc = jnp.abs(ch - pltpu.roll(ch, shift=W - 1, axis=1)).astype(jnp.float32)
            dyc = jnp.abs(ch - pltpu.roll(ch, shift=TH - 1, axis=0)).astype(jnp.float32)
            sx = dxc if sx is None else sx + dxc
            sy = dyc if sy is None else sy + dyc

        v = val_ref[0, 0]                                             # (TH, W)
        wx = jnp.exp(-jnp.abs(v - pltpu.roll(v, shift=W - 1, axis=1)).astype(jnp.float32))
        wy = jnp.exp(-jnp.abs(v - pltpu.roll(v, shift=TH - 1, axis=0)).astype(jnp.float32))

        # Boundary masks from small iotas (broadcast inside the where).
        col = jax.lax.broadcasted_iota(jnp.int32, (1, W), 1)
        row = jax.lax.broadcasted_iota(jnp.int32, (TH, 1), 0)

        # Weights factored out of the channel sum (valid: wx, wy > 0).
        term_x = jnp.where(col < W - 1, wx * sx, 0.0)                 # (TH, W)
        term_y = wy * sy                                              # (TH, W)
        if padded:
            tile_start = h * TH
            x_lim = jnp.minimum(TH, real_h - tile_start)       # rows with valid x-grad
            y_lim = jnp.minimum(TH - 1, real_h - 1 - tile_start)  # rows with valid y-grad
            contrib = (jnp.where(row < x_lim, term_x, 0.0)
                       + jnp.where(row < y_lim, term_y, 0.0))
        else:
            contrib = term_x + jnp.where(row < TH - 1, term_y, 0.0)

        # Sublane-folded accumulate: (TH, W) -> (8, W), pure cross-vreg VPU adds.
        if TH > 8:
            folded = contrib.reshape(TH // 8, 8, W).sum(axis=0)
        else:
            folded = contrib
        acc_ref[...] += folded

        # Carry this tile's last rows for the next tile's halo term.
        carry_img_ref[...] = img_ref[0, :, TH - 1, :].astype(jnp.float32)
        carry_val_ref[...] = val_ref[0, :, TH - 1, :].astype(jnp.float32)

        # Epilogue: one cross-lane reduce per batch element, lane-dense store.
        @pl.when(h == n_h - 1)
        def _finish():
            total = jnp.sum(acc_ref[...])
            out_ref[...] = jnp.full(out_ref.shape, total * inv_count,
                                    dtype=out_ref.dtype)

    return kernel


def _choose_tile_h(h_pad, C, W, itemsize, *, max_tile_h=512,
                   block_budget_bytes=4 << 20):
    """Largest H-tile that (a) divides padded H, (b) is a multiple of 8, and
    (c) keeps a single (image+vals) input block within the VMEM budget."""
    per_row = max((C + 1) * W * itemsize, 1)
    budget_rows = max(8, block_budget_bytes // per_row)
    cap = min(int(max_tile_h), int(budget_rows), int(h_pad))
    cap -= cap % 8
    cap = max(cap, 8)
    for th in range(cap, 7, -8):
        if h_pad % th == 0:
            return th
    return 8  # h_pad is a multiple of 8, so this always divides


def smoothness_loss(images: jax.Array, vals: jax.Array, *,
                    max_tile_h: int = 512,
                    block_budget_bytes: int = 4 << 20) -> jax.Array:
    """images: (..., C, H, W); vals: (..., 1, H, W) -> loss of shape (...)."""
    lead = images.shape[:-3]
    C, H, W = images.shape[-3:]
    assert vals.shape[-3:] == (1, H, W), "vals must be (..., 1, H, W)"
    assert vals.shape[:-3] == lead, "images and vals must share leading dims"

    B = 1
    for d in lead:
        B *= d
    img = images.reshape(B, C, H, W)   # native dtype preserved (bf16 ok)
    val = vals.reshape(B, 1, H, W)

    # Pad ragged H to a multiple of 8 with zeros; pad rows are masked in-kernel.
    H_pad = ((H + 7) // 8) * 8
    if H_pad != H:
        padding = ((0, 0), (0, 0), (0, H_pad - H), (0, 0))
        img = jnp.pad(img, padding)
        val = jnp.pad(val, padding)

    itemsize = jnp.dtype(img.dtype).itemsize
    TH = _choose_tile_h(H_pad, C, W, itemsize, max_tile_h=max_tile_h,
                        block_budget_bytes=block_budget_bytes)
    n_h = H_pad // TH

    kernel = _make_smoothness_kernel(
        C=C, TH=TH, W=W, real_h=H, n_h=n_h,
        inv_count=1.0 / float(C * H * W), padded=(H_pad != H))

    # Explicit VMEM budget: double-buffered inputs + output block + scratch.
    block_bytes = (C + 1) * TH * W * itemsize
    vmem_need = 2 * block_bytes + 2 * 8 * 128 * 4 + (8 + C + 1) * W * 4
    vmem_limit = int(min(48 << 20, max(16 << 20, 2 * vmem_need)))

    out = pl.pallas_call(
        kernel,
        out_shape=jax.ShapeDtypeStruct((B, 8, 128), jnp.float32),
        grid=(B, n_h),
        in_specs=[
            pl.BlockSpec((1, C, TH, W), lambda b, h: (b, 0, h, 0)),
            pl.BlockSpec((1, 1, TH, W), lambda b, h: (b, 0, h, 0)),
        ],
        out_specs=pl.BlockSpec((1, 8, 128), lambda b, h: (b, 0, 0)),
        scratch_shapes=[
            pltpu.VMEM((8, W), jnp.float32),    # sublane-folded accumulator
            pltpu.VMEM((C, W), jnp.float32),    # carried last image row (halo)
            pltpu.VMEM((1, W), jnp.float32),    # carried last vals row (halo)
        ],
        compiler_params=pltpu.CompilerParams(
            dimension_semantics=("parallel", "arbitrary"),
            vmem_limit_bytes=vmem_limit),
    )(img, val)

    return out[:, 0, 0].reshape(lead)


def _smoothness_loss_ref(images, vals):
    """Pure-JAX reference of the PyTorch module (for verification)."""
    def xgrad(a):
        shifted = jnp.concatenate([a[..., 1:], a[..., -1:]], axis=-1)
        return a - shifted

    def ygrad(a):
        shifted = jnp.concatenate([a[..., 1:, :], a[..., -1:, :]], axis=-2)
        return a - shifted

    img_gx, img_gy = xgrad(images), ygrad(images)
    val_gx, val_gy = xgrad(vals), ygrad(vals)
    wx = jnp.exp(-jnp.mean(jnp.abs(val_gx), axis=-3, keepdims=True))
    wy = jnp.exp(-jnp.mean(jnp.abs(val_gy), axis=-3, keepdims=True))
    s = jnp.abs(img_gx * wx) + jnp.abs(img_gy * wy)
    return jnp.mean(s, axis=(-3, -2, -1))


if __name__ == "__main__":
    key = jax.random.PRNGKey(0)
    k1, k2, k3, k4 = jax.random.split(key, 4)

    # Case 1: aligned shapes, single H tile.
    B, C, H, W = 2, 4, 16, 16
    images = jax.random.normal(k1, (B, C, H, W), dtype=jnp.float32)
    vals = jax.random.normal(k2, (B, 1, H, W), dtype=jnp.float32)
    ref = jax.block_until_ready(_smoothness_loss_ref(images, vals))

    out = jax.block_until_ready(smoothness_loss(images, vals))
    assert out.shape == (B,), out.shape
    assert jnp.allclose(out, ref, atol=1e-5, rtol=1e-5), (out, ref)

    # Case 2: multiple H tiles (exercises halo carry + folded accumulator).
    out_tiled = jax.block_until_ready(smoothness_loss(images, vals, max_tile_h=8))
    assert jnp.allclose(out_tiled, ref, atol=1e-5, rtol=1e-5), (out_tiled, ref)

    # Case 3: ragged H (pad + in-kernel row masking), B=1, C=3.
    B2, C2, H2, W2 = 1, 3, 13, 24
    images2 = jax.random.normal(k3, (B2, C2, H2, W2), dtype=jnp.float32)
    vals2 = jax.random.normal(k4, (B2, 1, H2, W2), dtype=jnp.float32)
    ref2 = jax.block_until_ready(_smoothness_loss_ref(images2, vals2))

    out2 = jax.block_until_ready(smoothness_loss(images2, vals2))
    assert out2.shape == (B2,), out2.shape
    assert jnp.allclose(out2, ref2, atol=1e-5, rtol=1e-5), (out2, ref2)

    # Case 4: ragged H with multiple tiles (pad + halo together).
    out2_tiled = jax.block_until_ready(
        smoothness_loss(images2, vals2, max_tile_h=8))
    assert jnp.allclose(out2_tiled, ref2, atol=1e-5, rtol=1e-5), (out2_tiled, ref2)

    print("KERNEL_OK")
</pallas_src>

<mosaic_0001>
module attributes {stable_mosaic.version = 11 : i64} {
  func.func @kernel(%arg0: i32, %arg1: i32, %arg2: memref<1x4x16x16xf32, #tpu.memory_space<vmem>>, %arg3: memref<1x1x16x16xf32, #tpu.memory_space<vmem>>, %arg4: memref<1x8x128xf32, #tpu.memory_space<vmem>>, %arg5: memref<8x16xf32, #tpu.memory_space<vmem>>, %arg6: memref<4x16xf32, #tpu.memory_space<vmem>>, %arg7: memref<1x16xf32, #tpu.memory_space<vmem>>) attributes {dimension_semantics = [#tpu.dimension_semantics<parallel>, #tpu.dimension_semantics<arbitrary>], iteration_bounds = array<i64: 2, 1>, scalar_prefetch = 0 : i64, scratch_operands = 3 : i64, tpu.core_type = #tpu.core_type<tc>, window_params = [{transform_indices = @transform_0, window_bounds = array<i64: 1, 4, 16, 16>}, {transform_indices = @transform_1, window_bounds = array<i64: 1, 1, 16, 16>}, {transform_indices = @transform_2, window_bounds = array<i64: 1, 8, 128>}]} {
    %c0_i32 = arith.constant 0 : i32
    %0 = arith.cmpi eq, %arg1, %c0_i32 : i32
    %1 = arith.extui %0 : i1 to i32
    %c0_i32_0 = arith.constant 0 : i32
    %2 = arith.cmpi ne, %1, %c0_i32_0 : i32
    scf.if %2 {
      %cst_51 = arith.constant 0.000000e+00 : f32
      %89 = vector.broadcast %cst_51 : f32 to vector<8x16xf32>
      %c0_52 = arith.constant 0 : index
      %c0_53 = arith.constant 0 : index
      %90 = vector.load %arg5[%c0_52, %c0_53] : memref<8x16xf32, #tpu.memory_space<vmem>>, vector<8x16xf32>
      tpu.vector_store %arg5[%c0_52, %c0_53], %89 {strides = array<i32>} : memref<8x16xf32, #tpu.memory_space<vmem>>, vector<8x16xf32>,
    } else {
    }
    %c0_i32_1 = arith.constant 0 : i32
    %3 = arith.cmpi sgt, %arg1, %c0_i32_1 : i32
    %4 = arith.extui %3 : i1 to i32
    %c0_i32_2 = arith.constant 0 : i32
    %5 = arith.cmpi ne, %4, %c0_i32_2 : i32
    scf.if %5 {
      %c0_51 = arith.constant 0 : index
      %c0_52 = arith.constant 0 : index
      %c0_53 = arith.constant 0 : index
      %c0_54 = arith.constant 0 : index
      %89 = vector.load %arg2[%c0_51, %c0_52, %c0_53, %c0_54] : memref<1x4x16x16xf32, #tpu.memory_space<vmem>>, vector<1x4x1x16xf32>
      %90 = vector.shape_cast %89 : vector<1x4x1x16xf32> to vector<4x16xf32>
      %c0_55 = arith.constant 0 : index
      %c0_56 = arith.constant 0 : index
      %c0_57 = arith.constant 0 : index
      %c0_58 = arith.constant 0 : index
      %91 = vector.load %arg3[%c0_55, %c0_56, %c0_57, %c0_58] : memref<1x1x16x16xf32, #tpu.memory_space<vmem>>, vector<1x1x1x16xf32>
      %92 = vector.shape_cast %91 : vector<1x1x1x16xf32> to vector<1x16xf32>
      %c0_59 = arith.constant 0 : index
      %c0_60 = arith.constant 0 : index
      %93 = vector.load %arg6[%c0_59, %c0_60] : memref<4x16xf32, #tpu.memory_space<vmem>>, vector<4x16xf32>
      %94 = arith.subf %93, %90 : vector<4x16xf32>
      %95 = math.absf %94 : vector<4x16xf32>
      %cst_61 = arith.constant dense<0.000000e+00> : vector<16xf32>
      %96 = vector.multi_reduction <add>, %95, %cst_61 [0] : vector<4x16xf32> to vector<16xf32>
      %97 = vector.shape_cast %96 : vector<16xf32> to vector<1x16xf32>
      %c0_62 = arith.constant 0 : index
      %c0_63 = arith.constant 0 : index
      %98 = vector.load %arg7[%c0_62, %c0_63] : memref<1x16xf32, #tpu.memory_space<vmem>>, vector<1x16xf32>
      %99 = arith.subf %98, %92 : vector<1x16xf32>
      %100 = math.absf %99 : vector<1x16xf32>
      %cst_64 = arith.constant 0.000000e+00 : f32
      %101 = vector.broadcast %cst_64 : f32 to vector<1x16xf32>
      %102 = arith.subf %101, %100 : vector<1x16xf32>
      %103 = math.exp %102 : vector<1x16xf32>
      %c0_65 = arith.constant 0 : index
      %c0_66 = arith.constant 0 : index
      %104 = vector.load %arg5[%c0_65, %c0_66] : memref<8x16xf32, #tpu.memory_space<vmem>>, vector<1x16xf32>
      %105 = arith.mulf %103, %97 : vector<1x16xf32>
      %106 = arith.addf %104, %105 : vector<1x16xf32>
      %c0_67 = arith.constant 0 : index
      %c0_68 = arith.constant 0 : index
      %107 = vector.load %arg5[%c0_67, %c0_68] : memref<8x16xf32, #tpu.memory_space<vmem>>, vector<1x16xf32>
      tpu.vector_store %arg5[%c0_67, %c0_68], %106 {strides = array<i32>} : memref<8x16xf32, #tpu.memory_space<vmem>>, vector<1x16xf32>,
    } else {
    }
    %c0 = arith.constant 0 : index
    %c0_3 = arith.constant 0 : index
    %c0_4 = arith.constant 0 : index
    %c0_5 = arith.constant 0 : index
    %6 = vector.load %arg2[%c0, %c0_3, %c0_4, %c0_5] : memref<1x4x16x16xf32, #tpu.memory_space<vmem>>, vector<1x1x16x16xf32>
    %7 = vector.shape_cast %6 : vector<1x1x16x16xf32> to vector<16x16xf32>
    %c15_i32 = arith.constant 15 : i32
    %8 = tpu.dynamic_rotate %7 by %c15_i32 dim 1 : vector<16x16xf32>, i32 -> vector<16x16xf32>
    %9 = arith.subf %7, %8 : vector<16x16xf32>
    %10 = math.absf %9 : vector<16x16xf32>
    %c15_i32_6 = arith.constant 15 : i32
    %11 = tpu.dynamic_rotate %7 by %c15_i32_6 dim 0 : vector<16x16xf32>, i32 -> vector<16x16xf32>
    %12 = arith.subf %7, %11 : vector<16x16xf32>
    %13 = math.absf %12 : vector<16x16xf32>
    %c0_7 = arith.constant 0 : index
    %c1 = arith.constant 1 : index
    %c0_8 = arith.constant 0 : index
    %c0_9 = arith.constant 0 : index
    %14 = vector.load %arg2[%c0_7, %c1, %c0_8, %c0_9] : memref<1x4x16x16xf32, #tpu.memory_space<vmem>>, vector<1x1x16x16xf32>
    %15 = vector.shape_cast %14 : vector<1x1x16x16xf32> to vector<16x16xf32>
    %c15_i32_10 = arith.constant 15 : i32
    %16 = tpu.dynamic_rotate %15 by %c15_i32_10 dim 1 : vector<16x16xf32>, i32 -> vector<16x16xf32>
    %17 = arith.subf %15, %16 : vector<16x16xf32>
    %18 = math.absf %17 : vector<16x16xf32>
    %c15_i32_11 = arith.constant 15 : i32
    %19 = tpu.dynamic_rotate %15 by %c15_i32_11 dim 0 : vector<16x16xf32>, i32 -> vector<16x16xf32>
    %20 = arith.subf %15, %19 : vector<16x16xf32>
    %21 = math.absf %20 : vector<16x16xf32>
    %22 = arith.addf %10, %18 : vector<16x16xf32>
    %23 = arith.addf %13, %21 : vector<16x16xf32>
    %c0_12 = arith.constant 0 : index
    %c2 = arith.constant 2 : index
    %c0_13 = arith.constant 0 : index
    %c0_14 = arith.constant 0 : index
    %24 = vector.load %arg2[%c0_12, %c2, %c0_13, %c0_14] : memref<1x4x16x16xf32, #tpu.memory_space<vmem>>, vector<1x1x16x16xf32>
    %25 = vector.shape_cast %24 : vector<1x1x16x16xf32> to vector<16x16xf32>
    %c15_i32_15 = arith.constant 15 : i32
    %26 = tpu.dynamic_rotate %25 by %c15_i32_15 dim 1 : vector<16x16xf32>, i32 -> vector<16x16xf32>
    %27 = arith.subf %25, %26 : vector<16x16xf32>
    %28 = math.absf %27 : vector<16x16xf32>
    %c15_i32_16 = arith.constant 15 : i32
    %29 = tpu.dynamic_rotate %25 by %c15_i32_16 dim 0 : vector<16x16xf32>, i32 -> vector<16x16xf32>
    %30 = arith.subf %25, %29 : vector<16x16xf32>
    %31 = math.absf %30 : vector<16x16xf32>
    %32 = arith.addf %22, %28 : vector<16x16xf32>
    %33 = arith.addf %23, %31 : vector<16x16xf32>
    %c0_17 = arith.constant 0 : index
    %c3 = arith.constant 3 : index
    %c0_18 = arith.constant 0 : index
    %c0_19 = arith.constant 0 : index
    %34 = vector.load %arg2[%c0_17, %c3, %c0_18, %c0_19] : memref<1x4x16x16xf32, #tpu.memory_space<vmem>>, vector<1x1x16x16xf32>
    %35 = vector.shape_cast %34 : vector<1x1x16x16xf32> to vector<16x16xf32>
    %c15_i32_20 = arith.constant 15 : i32
    %36 = tpu.dynamic_rotate %35 by %c15_i32_20 dim 1 : vector<16x16xf32>, i32 -> vector<16x16xf32>
    %37 = arith.subf %35, %36 : vector<16x16xf32>
    %38 = math.absf %37 : vector<16x16xf32>
    %c15_i32_21 = arith.constant 15 : i32
    %39 = tpu.dynamic_rotate %35 by %c15_i32_21 dim 0 : vector<16x16xf32>, i32 -> vector<16x16xf32>
    %40 = arith.subf %35, %39 : vector<16x16xf32>
    %41 = math.absf %40 : vector<16x16xf32>
    %42 = arith.addf %32, %38 : vector<16x16xf32>
    %43 = arith.addf %33, %41 : vector<16x16xf32>
    %c0_22 = arith.constant 0 : index
    %c0_23 = arith.constant 0 : index
    %c0_24 = arith.constant 0 : index
    %c0_25 = arith.constant 0 : index
    %44 = vector.load %arg3[%c0_22, %c0_23, %c0_24, %c0_25] : memref<1x1x16x16xf32, #tpu.memory_space<vmem>>, vector<1x1x16x16xf32>
    %45 = vector.shape_cast %44 : vector<1x1x16x16xf32> to vector<16x16xf32>
    %c15_i32_26 = arith.constant 15 : i32
    %46 = tpu.dynamic_rotate %45 by %c15_i32_26 dim 1 : vector<16x16xf32>, i32 -> vector<16x16xf32>
    %47 = arith.subf %45, %46 : vector<16x16xf32>
    %48 = math.absf %47 : vector<16x16xf32>
    %cst = arith.constant 0.000000e+00 : f32
    %49 = vector.broadcast %cst : f32 to vector<16x16xf32>
    %50 = arith.subf %49, %48 : vector<16x16xf32>
    %51 = math.exp %50 : vector<16x16xf32>
    %c15_i32_27 = arith.constant 15 : i32
    %52 = tpu.dynamic_rotate %45 by %c15_i32_27 dim 0 : vector<16x16xf32>, i32 -> vector<16x16xf32>
    %53 = arith.subf %45, %52 : vector<16x16xf32>
    %54 = math.absf %53 : vector<16x16xf32>
    %cst_28 = arith.constant 0.000000e+00 : f32
    %55 = vector.broadcast %cst_28 : f32 to vector<16x16xf32>
    %56 = arith.subf %55, %54 : vector<16x16xf32>
    %57 = math.exp %56 : vector<16x16xf32>
    %58 = tpu.iota {dimensions = array<i32: 1>} : vector<1x16xi32>
    %59 = tpu.iota {dimensions = array<i32: 0>} : vector<16x1xi32>
    %c15_i32_29 = arith.constant 15 : i32
    %60 = vector.broadcast %c15_i32_29 : i32 to vector<1x16xi32>
    %61 = arith.cmpi slt, %58, %60 : vector<1x16xi32>
    %62 = arith.mulf %51, %42 : vector<16x16xf32>
    %cst_30 = arith.constant 0.000000e+00 : f32
    %63 = vector.shape_cast %61 : vector<1x16xi1> to vector<1x16xi1>
    %64 = vector.broadcast %63 : vector<1x16xi1> to vector<16x16xi1>
    %65 = vector.broadcast %cst_30 : f32 to vector<16x16xf32>
    %66 = arith.select %64, %62, %65 : vector<16x16xi1>, vector<16x16xf32>
    %67 = arith.mulf %57, %43 : vector<16x16xf32>
    %c15_i32_31 = arith.constant 15 : i32
    %68 = vector.broadcast %c15_i32_31 : i32 to vector<16x1xi32>
    %69 = arith.cmpi slt, %59, %68 : vector<16x1xi32>
    %cst_32 = arith.constant 0.000000e+00 : f32
    %70 = vector.shape_cast %69 : vector<16x1xi1> to vector<16x1xi1>
    %71 = vector.broadcast %70 : vector<16x1xi1> to vector<16x16xi1>
    %72 = vector.broadcast %cst_32 : f32 to vector<16x16xf32>
    %73 = arith.select %71, %67, %72 : vector<16x16xi1>, vector<16x16xf32>
    %74 = arith.addf %66, %73 : vector<16x16xf32>
    %75 = vector.shape_cast %74 : vector<16x16xf32> to vector<2x8x16xf32>
    %cst_33 = arith.constant dense<0.000000e+00> : vector<8x16xf32>
    %76 = vector.multi_reduction <add>, %75, %cst_33 [0] : vector<2x8x16xf32> to vector<8x16xf32>
    %c0_34 = arith.constant 0 : index
    %c0_35 = arith.constant 0 : index
    %77 = vector.load %arg5[%c0_34, %c0_35] : memref<8x16xf32, #tpu.memory_space<vmem>>, vector<8x16xf32>
    %78 = arith.addf %77, %76 : vector<8x16xf32>
    %c0_36 = arith.constant 0 : index
    %c0_37 = arith.constant 0 : index
    %79 = vector.load %arg5[%c0_36, %c0_37] : memref<8x16xf32, #tpu.memory_space<vmem>>, vector<8x16xf32>
    tpu.vector_store %arg5[%c0_36, %c0_37], %78 {strides = array<i32>} : memref<8x16xf32, #tpu.memory_space<vmem>>, vector<8x16xf32>,
    %c0_38 = arith.constant 0 : index
    %c0_39 = arith.constant 0 : index
    %c15 = arith.constant 15 : index
    %c0_40 = arith.constant 0 : index
    %80 = vector.load %arg2[%c0_38, %c0_39, %c15, %c0_40] : memref<1x4x16x16xf32, #tpu.memory_space<vmem>>, vector<1x4x1x16xf32>
    %81 = vector.shape_cast %80 : vector<1x4x1x16xf32> to vector<4x16xf32>
    %c0_41 = arith.constant 0 : index
    %c0_42 = arith.constant 0 : index
    %82 = vector.load %arg6[%c0_41, %c0_42] : memref<4x16xf32, #tpu.memory_space<vmem>>, vector<4x16xf32>
    tpu.vector_store %arg6[%c0_41, %c0_42], %81 {strides = array<i32>} : memref<4x16xf32, #tpu.memory_space<vmem>>, vector<4x16xf32>,
    %c0_43 = arith.constant 0 : index
    %c0_44 = arith.constant 0 : index
    %c15_45 = arith.constant 15 : index
    %c0_46 = arith.constant 0 : index
    %83 = vector.load %arg3[%c0_43, %c0_44, %c15_45, %c0_46] : memref<1x1x16x16xf32, #tpu.memory_space<vmem>>, vector<1x1x1x16xf32>
    %84 = vector.shape_cast %83 : vector<1x1x1x16xf32> to vector<1x16xf32>
    %c0_47 = arith.constant 0 : index
    %c0_48 = arith.constant 0 : index
    %85 = vector.load %arg7[%c0_47, %c0_48] : memref<1x16xf32, #tpu.memory_space<vmem>>, vector<1x16xf32>
    tpu.vector_store %arg7[%c0_47, %c0_48], %84 {strides = array<i32>} : memref<1x16xf32, #tpu.memory_space<vmem>>, vector<1x16xf32>,
    %c0_i32_49 = arith.constant 0 : i32
    %86 = arith.cmpi eq, %arg1, %c0_i32_49 : i32
    %87 = arith.extui %86 : i1 to i32
    %c0_i32_50 = arith.constant 0 : i32
    %88 = arith.cmpi ne, %87, %c0_i32_50 : i32
    scf.if %88 {
      %c0_51 = arith.constant 0 : index
      %c0_52 = arith.constant 0 : index
      %89 = vector.load %arg5[%c0_51, %c0_52] : memref<8x16xf32, #tpu.memory_space<vmem>>, vector<8x16xf32>
      %90 = vector.shape_cast %89 : vector<8x16xf32> to vector<1x8x16xf32>
      %cst_53 = arith.constant dense<0.000000e+00> : vector<1xf32>
      %91 = vector.multi_reduction <add>, %90, %cst_53 [1, 2] : vector<1x8x16xf32> to vector<1xf32>
      %92 = vector.shape_cast %91 : vector<1xf32> to vector<1x1x1xf32>
      %93 = vector.extract %92[0, 0, 0] : f32 from vector<1x1x1xf32>
      %cst_54 = arith.constant 9.765625E-4 : f32
      %94 = arith.mulf %93, %cst_54 : f32
      %95 = vector.broadcast %94 : f32 to vector<1x8x128xf32>
      %c0_55 = arith.constant 0 : index
      %c0_56 = arith.constant 0 : index
      %c0_57 = arith.constant 0 : index
      %96 = vector.load %arg4[%c0_55, %c0_56, %c0_57] : memref<1x8x128xf32, #tpu.memory_space<vmem>>, vector<1x8x128xf32>
      tpu.vector_store %arg4[%c0_55, %c0_56, %c0_57], %95 {strides = array<i32>} : memref<1x8x128xf32, #tpu.memory_space<vmem>>, vector<1x8x128xf32>,
    } else {
    }
    return
  }
  func.func @transform_0(%arg0: i32, %arg1: i32) -> (i32, i32, i32, i32) {
    %c0_i32 = arith.constant 0 : i32
    %c0_i32_0 = arith.constant 0 : i32
    %c0_i32_1 = arith.constant 0 : i32
    return %arg0, %c0_i32, %arg1, %c0_i32_0 : i32, i32, i32, i32
  }
  func.func @transform_1(%arg0: i32, %arg1: i32) -> (i32, i32, i32, i32) {
    %c0_i32 = arith.constant 0 : i32
    %c0_i32_0 = arith.constant 0 : i32
    %c0_i32_1 = arith.constant 0 : i32
    return %arg0, %c0_i32, %arg1, %c0_i32_0 : i32, i32, i32, i32
  }
  func.func @transform_2(%arg0: i32, %arg1: i32) -> (i32, i32, i32) {
    %c0_i32 = arith.constant 0 : i32
    %c0_i32_0 = arith.constant 0 : i32
    %c0_i32_1 = arith.constant 0 : i32
    return %arg0, %c0_i32, %c0_i32_0 : i32, i32, i32
  }
}

</mosaic_0001>

<llo_original>
// kernel: tpu_custom_call.1
$region0: #{tpu_custom_call.1}
  #allocation0 [shape = 'u32[]', space=smem, size = 0x4, offset = 0x4, fixed_abs, tag = 'smem constant byte address 0x4 - core index']
  #allocation1 [shape = 'u32[144,128]{1,0:T(1,128)}', space=vmem, size = 0x12000, scoped, tag = 'internal scratch']
  #allocation2 [shape = 'f32[8,16]{1,0:T(8,128)}', space=vmem, size = 0x1000, scoped, tag = 'scratch operand']
  #allocation3 [shape = 'f32[4,16]{1,0:T(4,128)}', space=vmem, size = 0x800, scoped, tag = 'scratch operand']
  #allocation4 [shape = 'f32[1,16]{1,0:T(1,128)}', space=vmem, size = 0x200, scoped, tag = 'scratch operand']
  %s0 = inlined_call_operand.hbm [shape: f32[2,4,16,16], index: 0, kind: input, shape index: {}]
  %s1 = inlined_call_operand.hbm [shape: f32[2,1,16,16], index: 1, kind: input, shape index: {}]
  %s2 = inlined_call_operand.hbm [shape: f32[2,8,128], index: 2, kind: output, shape index: {}]
  %s3 = sld [smem:[#allocation0]]
  $region61: #{tpu_custom_call.1} parent=0
    _
  %s5 = ssub.s32 1, %s3
  %s6 = scalar_select 0, %s5, %s3
  $region1: #{tpu_custom_call.1} parent=0
    #allocation5 [shape = 'u8[65536]{0}', space=vmem, size = 0x10000, scoped, tag = 'input window, operand 0']
    #allocation6 [shape = 's32[2]{0}', space=sflag, size = 0x8, scoped, tag = 'scoped memory for tpu_custom_call.1']
    #allocation7 [shape = 's32[2]{0}', space=sflag, size = 0x8, scoped, tag = 'scoped memory for tpu_custom_call.1']
    #allocation8 [shape = 'u8[16384]{0}', space=vmem, size = 0x4000, scoped, tag = 'input window, operand 1']
    #allocation9 [shape = 's32[2]{0}', space=sflag, size = 0x8, scoped, tag = 'scoped memory for tpu_custom_call.1']
    #allocation10 [shape = 'u8[8192]{0}', space=vmem, size = 0x2000, scoped, tag = 'output window, operand 0']
    %7 = vsyncpa [#allocation6], 0
    %s8 = scalar_lea.sflag [#allocation6], 1
    %9 = vsyncpa %s8, 0
    %10 = vsyncpa [#allocation9], 0
    %s11 = scalar_lea.sflag [#allocation9], 1
    %12 = vsyncpa %s11, 0
    %13 = vsyncpa [#allocation7], 0
    %s14 = scalar_lea.sflag [#allocation7], 1
    %15 = vsyncpa %s14, 0
    loop: start=0, step=1, limit=4
    $region2: #{tpu_custom_call.1} parent=1 // loop_pre_header
      _
    $region3: #{tpu_custom_call.1} parent=1 // loop_header
      %s17 = sphi 0, %s21
      %p18 = scmp.ge.s32.totalorder %s17, 4
      %s24 = sphi 0, %s36
      %s25 = sphi 0, %s32
      %s26 = sphi 0, %s24
      %s27 = sphi 0, %s25
      %s28 = sphi 0, %s26
      %s29 = sphi 0, %s27
      %s41 = sphi 0, %s43
      %s44 = sphi 0, %s41
      %s45 = sphi 0, %s44
      %s61 = sphi 0, %s45
      %s69 = sphi 0, %s71
      %s72 = sphi 0, %s69
      %s73 = sphi 0, %s72
      %s89 = sphi 0, %s73
      %s95 = sphi 0, %s97
      %s98 = sphi 0, %s95
      %s99 = sphi 0, %s98
      %s115 = sphi 0, %s99
    $region4: #{tpu_custom_call.1} parent=1 // loop_header_branch
      %20 = sbr.rel (%p18) target = $region8
    $region5: #{tpu_custom_call.1} parent=1 // loop_body
      %s22 = ssub.s32 %s17, 1
      %s23 = ssub.s32 %s17, 2
      %s30 = sadd.s32 1, %s25
      %p31 = scmp.ge.s32.totalorder %s30, 1
      %s32 = scalar_select %p31, 0, %s30
      %s33 = sadd.s32 1, %s24
      %s34 = scalar_select %p31, %s33, %s24
      %p35 = scmp.ge.s32.totalorder %s34, 2
      %s36 = scalar_select %p35, 0, %s34
      %s37 = ssub.s32 %s24, %s36
      %s38 = ssub.s32 %s25, %s32
      %s39 = sor.u32 %s37, %s38
      %p40 = scmp.eq.s32.totalorder %s39, 0
      %s42 = sadd.s32 %s41, 1
      %s43 = scalar_select %p40, %s41, %s42
      %p46 = pneg %p40
      %p47 = scmp.eq.s32.totalorder %s17, 1
      %p48 = por %p46, %p47
      %p49 = scmp.ne.s32.totalorder %s41, %s44
      %p50 = scmp.eq.s32.totalorder %s17, 0
      %p51 = por %p49, %p50
      %p52 = scmp.ne.s32.totalorder %s41, %s44
      %p53 = scmp.eq.s32.totalorder %s22, 1
      %p54 = por %p52, %p53
      %p55 = scmp.ne.s32.totalorder %s44, %s45
      %p56 = scmp.eq.s32.totalorder %s22, 0
      %p57 = por %p55, %p56
      %p58 = scmp.ne.s32.totalorder %s44, %s45
      %p59 = scmp.eq.s32.totalorder %s23, 1
      %p60 = por %p58, %p59
      %p62 = scmp.ne.s32.totalorder %s45, %s61
      %p63 = scmp.eq.s32.totalorder %s23, 0
      %p64 = por %p62, %p63
      %s65 = ssub.s32 %s24, %s36
      %s66 = ssub.s32 %s25, %s32
      %s67 = sor.u32 %s65, %s66
      %p68 = scmp.eq.s32.totalorder %s67, 0
      %s70 = sadd.s32 %s69, 1
      %s71 = scalar_select %p68, %s69, %s70
      %p74 = pneg %p68
      %p75 = scmp.eq.s32.totalorder %s17, 1
      %p76 = por %p74, %p75
      %p77 = scmp.ne.s32.totalorder %s69, %s72
      %p78 = scmp.eq.s32.totalorder %s17, 0
      %p79 = por %p77, %p78
      %p80 = scmp.ne.s32.totalorder %s69, %s72
      %p81 = scmp.eq.s32.totalorder %s22, 1
      %p82 = por %p80, %p81
      %p83 = scmp.ne.s32.totalorder %s72, %s73
      %p84 = scmp.eq.s32.totalorder %s22, 0
      %p85 = por %p83, %p84
      %p86 = scmp.ne.s32.totalorder %s72, %s73
      %p87 = scmp.eq.s32.totalorder %s23, 1
      %p88 = por %p86, %p87
      %p90 = scmp.ne.s32.totalorder %s73, %s89
      %p91 = scmp.eq.s32.totalorder %s23, 0
      %p92 = por %p90, %p91
      %s93 = ssub.s32 %s24, %s36
      %p94 = scmp.eq.s32.totalorder %s93, 0
      %s96 = sadd.s32 %s95, 1
      %s97 = scalar_select %p94, %s95, %s96
      %p100 = pneg %p94
      %p101 = scmp.eq.s32.totalorder %s17, 1
      %p102 = por %p100, %p101
      %p103 = scmp.ne.s32.totalorder %s95, %s98
      %p104 = scmp.eq.s32.totalorder %s17, 0
      %p105 = por %p103, %p104
      %p106 = scmp.ne.s32.totalorder %s95, %s98
      %p107 = scmp.eq.s32.totalorder %s22, 1
      %p108 = por %p106, %p107
      %p109 = scmp.ne.s32.totalorder %s98, %s99
      %p110 = scmp.eq.s32.totalorder %s22, 0
      %p111 = por %p109, %p110
      %p112 = scmp.ne.s32.totalorder %s98, %s99
      %p113 = scmp.eq.s32.totalorder %s23, 1
      %p114 = por %p112, %p113
      %p116 = scmp.ne.s32.totalorder %s99, %s115
      %p117 = scmp.eq.s32.totalorder %s23, 0
      %p118 = por %p116, %p117
      %p119 = scmp.le.s32.totalorder 1, %s17
      %p120 = scmp.lt.s32.totalorder %s17, 3
      %p121 = pnand %p119, %p120
      %p122 = pneg %p121
      // Predicated region
      $region9: #{tpu_custom_call.1} parent=5 // pred_check
        _
      $region10: #{tpu_custom_call.1} parent=5 // pred_check_branch
        %124 = sbr.rel (%p121) target = $region12
      $region11: #{tpu_custom_call.1} parent=5 // pred_region
        %s125 = ssub.s32 %s17, 1
      $region12: #{tpu_custom_call.1} parent=5 // pred_fallthru
        _
      %p126 = scmp.lt.s32.totalorder %s17, 2
      // Predicated region
      $region13: #{tpu_custom_call.1} parent=5 // pred_check
        %p127 = pneg %p126
      $region14: #{tpu_custom_call.1} parent=5 // pred_check_branch
        %129 = sbr.rel (%p127) target = $region16
      $region15: #{tpu_custom_call.1} parent=5 // pred_region
        // Predicated region
        $region17: #{tpu_custom_call.1} parent=15 // pred_check
          %p130 = pneg %p51
        $region18: #{tpu_custom_call.1} parent=15 // pred_check_branch
          %132 = sbr.rel (%p130) target = $region20
        $region19: #{tpu_custom_call.1} parent=15 // pred_region
          %s133 = sand.u32 %s41, 1
          %s134 = scalar_lea.sflag [#allocation6], %s133
          %s135 = sand.u32 %s41, 1
          %s136 = smul.addr %s135, 64
          %s137 = scalar_lea.vmem [#allocation5], %s136
          %s138 = smul.u32 2, %s25
          %s140 = ssub.s32 1024, 1024
          %141 = vsyncadd %s134, %s140
          %s142 = smul.addr %s24, 8
          %s143 = sadd.s32 %s138, %s142
          %s144 = smul.addr %s143, 128
          %s145 = scalar_lea.hbm %s0, %s144
          %s146 = sshll.u32 %s137, 4
          %s147 = int_to_ptr.vmem [resolvable:$true] %s146
          %152 = dma.hbm_to_vmem [thread:$0]  %s145, 1024, %s147, %s134, 128, 128, 8
        $region20: #{tpu_custom_call.1} parent=15 // pred_fallthru
          _
        // Predicated region
        $region21: #{tpu_custom_call.1} parent=15 // pred_check
          %p153 = pneg %p79
        $region22: #{tpu_custom_call.1} parent=15 // pred_check_branch
          %155 = sbr.rel (%p153) target = $region24
        $region23: #{tpu_custom_call.1} parent=15 // pred_region
          %s156 = sand.u32 %s69, 1
          %s157 = scalar_lea.sflag [#allocation9], %s156
          %s158 = sand.u32 %s69, 1
          %s159 = smul.addr %s158, 16
          %s160 = scalar_lea.vmem [#allocation8], %s159
          %s161 = smul.u32 2, %s25
          %s163 = ssub.s32 256, 256
          %164 = vsyncadd %s157, %s163
          %s165 = smul.addr %s24, 2
          %s166 = sadd.s32 %s161, %s165
          %s167 = smul.addr %s166, 128
          %s168 = scalar_lea.hbm %s1, %s167
          %s169 = sshll.u32 %s160, 4
          %s170 = int_to_ptr.vmem [resolvable:$true] %s169
          %175 = dma.hbm_to_vmem [thread:$0]  %s168, 256, %s170, %s157, 128, 128, 8
        $region24: #{tpu_custom_call.1} parent=15 // pred_fallthru
          _
      $region16: #{tpu_custom_call.1} parent=5 // pred_fallthru
        _
      %p176 = scmp.le.s32.totalorder 1, %s17
      %p177 = scmp.lt.s32.totalorder %s17, 3
      %p178 = pnand %p176, %p177
      %p179 = pneg %p178
      // Predicated region
      $region25: #{tpu_custom_call.1} parent=5 // pred_check
        _
      $region26: #{tpu_custom_call.1} parent=5 // pred_check_branch
        %181 = sbr.rel (%p178) target = $region28
      $region27: #{tpu_custom_call.1} parent=5 // pred_region
        %s182 = ssub.s32 %s17, 1
        %s183 = sand.u32 %s44, 1
        %s184 = scalar_lea.sflag [#allocation6], %s183
        %s185 = sand.u32 %s44, 1
        %s186 = smul.addr %s185, 64
        %s187 = scalar_lea.vmem [#allocation5], %s186
        // Predicated region
        $region29: #{tpu_custom_call.1} parent=27 // pred_check
          %p188 = pneg %p57
        $region30: #{tpu_custom_call.1} parent=27 // pred_check_branch
          %190 = sbr.rel (%p188) target = $region32
        $region31: #{tpu_custom_call.1} parent=27 // pred_region
          %191 = dma.done %s184, 1024
        $region32: #{tpu_custom_call.1} parent=27 // pred_fallthru
          _
        %s192 = sand.u32 %s72, 1
        %s193 = scalar_lea.sflag [#allocation9], %s192
        %s194 = sand.u32 %s72, 1
        %s195 = smul.addr %s194, 16
        %s196 = scalar_lea.vmem [#allocation8], %s195
        // Predicated region
        $region33: #{tpu_custom_call.1} parent=27 // pred_check
          %p197 = pneg %p85
        $region34: #{tpu_custom_call.1} parent=27 // pred_check_branch
          %199 = sbr.rel (%p197) target = $region36
        $region35: #{tpu_custom_call.1} parent=27 // pred_region
          %200 = dma.done %s193, 256
        $region36: #{tpu_custom_call.1} parent=27 // pred_fallthru
          _
        %s201 = sand.u32 %s44, 1
        %s202 = scalar_lea.sflag [#allocation6], %s201
        %s203 = sand.u32 %s44, 1
        %s204 = smul.addr %s203, 64
        %s205 = scalar_lea.vmem [#allocation5], %s204
        %p206 = pneg %p57
        %p207 = pneg %p54
        %s208 = sand.u32 %s72, 1
        %s209 = scalar_lea.sflag [#allocation9], %s208
        %s210 = sand.u32 %s72, 1
        %s211 = smul.addr %s210, 16
        %s212 = scalar_lea.vmem [#allocation8], %s211
        %p213 = pneg %p85
        %p214 = pneg %p82
        %p215 = pneg %p111
        %p216 = pneg %p108
        %s217 = sand.u32 %s98, 1
        %s218 = scalar_lea.sflag [#allocation7], %s217
        %s219 = sand.u32 %s98, 1
        %s220 = smul.addr %s219, 8
        %s221 = scalar_lea.vmem [#allocation10], %s220
        %s222 = smul.u32 2, %s27
        %s223 = smul.u32 2, %s27
        %p224 = scmp.eq.s32.totalorder %s27, 0
        // Predicated region
        $region37: #{tpu_custom_call.1} parent=27 // pred_check
          %p225 = pneg %p224
        $region38: #{tpu_custom_call.1} parent=27 // pred_check_branch
          %227 = sbr.rel (%p225) target = $region40
        $region39: #{tpu_custom_call.1} parent=27 // pred_region
          %vm228 = vcmask 130048
          %229 = vst.msk [vmem:[#allocation2] sm:$0xff] %vm228, 0.0
        $region40: #{tpu_custom_call.1} parent=27 // pred_fallthru
          _
        %p230 = scmp.gt.s32.totalorder %s27, 0
        // Predicated region
        $region41: #{tpu_custom_call.1} parent=27 // pred_check
          %p231 = pneg %p230
        $region42: #{tpu_custom_call.1} parent=27 // pred_check_branch
          %233 = sbr.rel (%p231) target = $region44
        $region43: #{tpu_custom_call.1} parent=27 // pred_region
          %v234 = vld [vmem:[%s187] sm:$0x1]
          %v235 = vld [vmem:[%s187 + $0x10] sm:$0x1]
          %v236 = vld [vmem:[%s187 + $0x20] sm:$0x1]
          %v237 = vld [vmem:[%s187 + $0x30] sm:$0x1]
          %v238 = vld [vmem:[%s196] sm:$0x1]
          %v239 = vld [vmem:[#allocation3] sm:$0xf]
          %v244 = vrot.slane %v235, 7
          %vm245 = vcmask 1041409
          %v246 = vsel %vm245, %v244, %v234
          %v247 = vrot.slane %v236, 6
          %vm248 = vcmask 1042434
          %v249 = vsel %vm248, %v247, %v246
          %v250 = vrot.slane %v237, 5
          %vm251 = vcmask 1043459
          %v252 = vsel %vm251, %v250, %v249
          %v254 = vsub.f32 %v239, %v252
          %v255 = vand.u32 2147483647, %v254
          %vm256 = vcmask 125952
          %v257 = vsel %vm256, %v255, 0.0
          %v258 = vrot.slane %v257, 4
          %v259 = vadd.f32 %v257, %v258
          %v260 = vrot.slane %v259, 2
          %v261 = vadd.f32 %v259, %v260
          %v262 = vrot.slane %v261, 1
          %v263 = vadd.f32 %v261, %v262
          %v264 = vld [vmem:[#allocation4] sm:$0x1]
          %v265 = vsub.f32 %v264, %v238
          %v266 = vand.u32 2147483647, %v265
          %v267 = vsub.f32 0.0, %v266
          %v268 = vmul.f32 %v267, 1.442695
          %v269 = vpow.pop %v268
          %v270 = vld [vmem:[#allocation2] sm:$0x1]
          %v271 = vmul.f32 %v269, %v263
          %v272 = vadd.f32 %v270, %v271
          %vm273 = vcmask 122880
          %274 = vst.msk [vmem:[#allocation2] sm:$0x1] %vm273, %v272
        $region44: #{tpu_custom_call.1} parent=27 // pred_fallthru
          _
        %v275 = vld [vmem:[%s187] sm:$0xff]
        %v276 = vld [vmem:[%s187 + $0x8] sm:$0xff]
        %vm277 = vcmask 1047680
        %278 = vrot.lane.b32.xlu0 %v275, 16
        %v279 = vpop.permute.xlu0 %278
        %v280 = vsel %vm277, %v279, %v275
        %281 = vrot.lane.b32.xlu0 %v276, 16
        %v282 = vpop.permute.xlu0 %281
        %v283 = vsel %vm277, %v282, %v276
        %284 = vrot.lane.b32.xlu0 %v280, 16
        %v285 = vpop.permute.xlu0 %284
        %286 = vrot.lane.b32.xlu0 %v283, 16
        %v287 = vpop.permute.xlu0 %286
        %v288 = vsel %vm277, %v285, %v275
        %v289 = vsel %vm277, %v287, %v276
        %292 = vrot.lane.b32.xlu0 %v288, 127
        %v293 = vpop.permute.xlu0 %292
        %294 = vrot.lane.b32.xlu0 %v289, 127
        %v295 = vpop.permute.xlu0 %294
        %v298 = vsub.f32 %v275, %v293
        %v299 = vsub.f32 %v276, %v295
        %v300 = vand.u32 2147483647, %v298
        %v301 = vand.u32 2147483647, %v299
        %v302 = vrot.slane %v275, 1
        %v303 = vrot.slane %v276, 1
        %v304 = vlaneseq
        %v305 = vshrl.u32 %v304, 7
        %vm306 = vcmp.lt.s32.totalorder %v305, 7
        %v307 = vsel %vm306, %v302, %v303
        %v308 = vsel %vm306, %v303, %v302
        %v309 = vsub.f32 %v275, %v307
        %v310 = vsub.f32 %v276, %v308
        %v311 = vand.u32 2147483647, %v309
        %v312 = vand.u32 2147483647, %v310
        %s313 = scalar_lea.vmem %s187, 16 [#allocation5]
        %v314 = vld [vmem:[%s313] sm:$0xff]
        %v315 = vld [vmem:[%s313 + $0x8] sm:$0xff]
        %316 = vrot.lane.b32.xlu0 %v314, 16
        %v317 = vpop.permute.xlu0 %316
        %v318 = vsel %vm277, %v317, %v314
        %319 = vrot.lane.b32.xlu0 %v315, 16
        %v320 = vpop.permute.xlu0 %319
        %v321 = vsel %vm277, %v320, %v315
        %322 = vrot.lane.b32.xlu0 %v318, 16
        %v323 = vpop.permute.xlu0 %322
        %324 = vrot.lane.b32.xlu0 %v321, 16
        %v325 = vpop.permute.xlu0 %324
        %v326 = vsel %vm277, %v323, %v314
        %v327 = vsel %vm277, %v325, %v315
        %330 = vrot.lane.b32.xlu0 %v326, 127
        %v331 = vpop.permute.xlu0 %330
        %332 = vrot.lane.b32.xlu0 %v327, 127
        %v333 = vpop.permute.xlu0 %332
        %v336 = vsub.f32 %v314, %v331
        %v337 = vsub.f32 %v315, %v333
        %v338 = vand.u32 2147483647, %v336
        %v339 = vand.u32 2147483647, %v337
        %v340 = vrot.slane %v314, 1
        %v341 = vrot.slane %v315, 1
        %v342 = vsel %vm306, %v340, %v341
        %v343 = vsel %vm306, %v341, %v340
        %v344 = vsub.f32 %v314, %v342
        %v345 = vsub.f32 %v315, %v343
        %v346 = vand.u32 2147483647, %v344
        %v347 = vand.u32 2147483647, %v345
        %v348 = vadd.f32 %v300, %v338
        %v349 = vadd.f32 %v301, %v339
        %v350 = vadd.f32 %v311, %v346
        %v351 = vadd.f32 %v312, %v347
        %s352 = scalar_lea.vmem %s187, 32 [#allocation5]
        %v353 = vld [vmem:[%s352] sm:$0xff]
        %v354 = vld [vmem:[%s352 + $0x8] sm:$0xff]
        %355 = vrot.lane.b32.xlu0 %v353, 16
        %v356 = vpop.permute.xlu0 %355
        %v357 = vsel %vm277, %v356, %v353
        %358 = vrot.lane.b32.xlu0 %v354, 16
        %v359 = vpop.permute.xlu0 %358
        %v360 = vsel %vm277, %v359, %v354
        %361 = vrot.lane.b32.xlu0 %v357, 16
        %v362 = vpop.permute.xlu0 %361
        %363 = vrot.lane.b32.xlu0 %v360, 16
        %v364 = vpop.permute.xlu0 %363
        %v365 = vsel %vm277, %v362, %v353
        %v366 = vsel %vm277, %v364, %v354
        %369 = vrot.lane.b32.xlu0 %v365, 127
        %v370 = vpop.permute.xlu0 %369
        %371 = vrot.lane.b32.xlu0 %v366, 127
        %v372 = vpop.permute.xlu0 %371
        %v375 = vsub.f32 %v353, %v370
        %v376 = vsub.f32 %v354, %v372
        %v377 = vand.u32 2147483647, %v375
        %v378 = vand.u32 2147483647, %v376
        %v379 = vrot.slane %v353, 1
        %v380 = vrot.slane %v354, 1
        %v381 = vsel %vm306, %v379, %v380
        %v382 = vsel %vm306, %v380, %v379
        %v383 = vsub.f32 %v353, %v381
        %v384 = vsub.f32 %v354, %v382
        %v385 = vand.u32 2147483647, %v383
        %v386 = vand.u32 2147483647, %v384
        %v387 = vadd.f32 %v348, %v377
        %v388 = vadd.f32 %v349, %v378
        %v389 = vadd.f32 %v350, %v385
        %v390 = vadd.f32 %v351, %v386
        %s391 = scalar_lea.vmem %s187, 48 [#allocation5]
        %v392 = vld [vmem:[%s391] sm:$0xff]
        %v393 = vld [vmem:[%s391 + $0x8] sm:$0xff]
        %394 = vrot.lane.b32.xlu0 %v392, 16
        %v395 = vpop.permute.xlu0 %394
        %v396 = vsel %vm277, %v395, %v392
        %397 = vrot.lane.b32.xlu0 %v393, 16
        %v398 = vpop.permute.xlu0 %397
        %v399 = vsel %vm277, %v398, %v393
        %400 = vrot.lane.b32.xlu0 %v396, 16
        %v401 = vpop.permute.xlu0 %400
        %402 = vrot.lane.b32.xlu0 %v399, 16
        %v403 = vpop.permute.xlu0 %402
        %v404 = vsel %vm277, %v401, %v392
        %v405 = vsel %vm277, %v403, %v393
        %408 = vrot.lane.b32.xlu0 %v404, 127
        %v409 = vpop.permute.xlu0 %408
        %410 = vrot.lane.b32.xlu0 %v405, 127
        %v411 = vpop.permute.xlu0 %410
        %v414 = vsub.f32 %v392, %v409
        %v415 = vsub.f32 %v393, %v411
        %v416 = vand.u32 2147483647, %v414
        %v417 = vand.u32 2147483647, %v415
        %v418 = vrot.slane %v392, 1
        %v419 = vrot.slane %v393, 1
        %v420 = vsel %vm306, %v418, %v419
        %v421 = vsel %vm306, %v419, %v418
        %v422 = vsub.f32 %v392, %v420
        %v423 = vsub.f32 %v393, %v421
        %v424 = vand.u32 2147483647, %v422
        %v425 = vand.u32 2147483647, %v423
        %v426 = vadd.f32 %v387, %v416
        %v427 = vadd.f32 %v388, %v417
        %v428 = vadd.f32 %v389, %v424
        %v429 = vadd.f32 %v390, %v425
        %v430 = vld [vmem:[%s196] sm:$0xff]
        %v431 = vld [vmem:[%s196 + $0x8] sm:$0xff]
        %432 = vrot.lane.b32.xlu0 %v430, 16
        %v433 = vpop.permute.xlu0 %432
        %v434 = vsel %vm277, %v433, %v430
        %435 = vrot.lane.b32.xlu0 %v431, 16
        %v436 = vpop.permute.xlu0 %435
        %v437 = vsel %vm277, %v436, %v431
        %438 = vrot.lane.b32.xlu0 %v434, 16
        %v439 = vpop.permute.xlu0 %438
        %440 = vrot.lane.b32.xlu0 %v437, 16
        %v441 = vpop.permute.xlu0 %440
        %v442 = vsel %vm277, %v439, %v430
        %v443 = vsel %vm277, %v441, %v431
        %446 = vrot.lane.b32.xlu0 %v442, 127
        %v447 = vpop.permute.xlu0 %446
        %448 = vrot.lane.b32.xlu0 %v443, 127
        %v449 = vpop.permute.xlu0 %448
        %v452 = vsub.f32 %v430, %v447
        %v453 = vsub.f32 %v431, %v449
        %v454 = vand.u32 2147483647, %v452
        %v455 = vand.u32 2147483647, %v453
        %v456 = vsub.f32 0.0, %v454
        %v457 = vsub.f32 0.0, %v455
        %v458 = vmul.f32 %v456, 1.442695
        %v459 = vpow.pop %v458
        %v460 = vmul.f32 %v457, 1.442695
        %v461 = vpow.pop %v460
        %v462 = vrot.slane %v430, 1
        %v463 = vrot.slane %v431, 1
        %v464 = vsel %vm306, %v462, %v463
        %v465 = vsel %vm306, %v463, %v462
        %v466 = vsub.f32 %v430, %v464
        %v467 = vsub.f32 %v431, %v465
        %v468 = vand.u32 2147483647, %v466
        %v469 = vand.u32 2147483647, %v467
        %v470 = vsub.f32 0.0, %v468
        %v471 = vsub.f32 0.0, %v469
        %v472 = vmul.f32 %v470, 1.442695
        %v473 = vpow.pop %v472
        %v474 = vmul.f32 %v471, 1.442695
        %v475 = vpow.pop %v474
        %v476 = vlaneseq
        %v477 = vand.u32 %v476, 127
        %v478 = vadd.s32 %v305, 8
        %vm479 = vcmp.lt.s32.totalorder %v477, 15
        %v480 = vmul.f32 %v459, %v426
        %v481 = vmul.f32 %v461, %v427
        %v482 = vsel %vm479, 1, 0
        %vm483 = vcmp.eq.s32.totalorder %v482, 1
        %v484 = vsel %vm483, %v480, 0.0
        %v485 = vsel %vm483, %v481, 0.0
        %v486 = vmul.f32 %v473, %v428
        %v487 = vmul.f32 %v475, %v429
        %vm488 = vcmp.lt.s32.totalorder %v305, 15
        %vm489 = vcmp.lt.s32.totalorder %v478, 15
        %v490 = vsel %vm488, 1, 0
        %v491 = vsel %vm489, 1, 0
        %vm492 = vcmp.eq.s32.totalorder %v490, 1
        %vm493 = vcmp.eq.s32.totalorder %v491, 1
        %v494 = vsel %vm492, %v486, 0.0
        %v495 = vsel %vm493, %v487, 0.0
        %v496 = vadd.f32 %v484, %v494
        %v497 = vadd.f32 %v485, %v495
        %vm498 = vcmask 130048
        %v499 = vsel %vm498, %v496, 0.0
        %v500 = vsel %vm498, %v497, 0.0
        %v501 = vadd.f32 %v499, %v500
        %v502 = vld [vmem:[#allocation2] sm:$0xff]
        %v503 = vadd.f32 %v502, %v501
        %504 = vst.msk [vmem:[#allocation2] sm:$0xff] %vm498, %v503
        %v505 = vld [vmem:[%s187 + $0xf] sm:$0x1]
        %v506 = vld [vmem:[%s187 + $0x1f] sm:$0x1]
        %v507 = vld [vmem:[%s187 + $0x2f] sm:$0x1]
        %v508 = vld [vmem:[%s187 + $0x3f] sm:$0x1]
        %v513 = vrot.slane %v506, 7
        %vm514 = vcmask 1041409
        %v515 = vsel %vm514, %v513, %v505
        %v516 = vrot.slane %v507, 6
        %vm517 = vcmask 1042434
        %v518 = vsel %vm517, %v516, %v515
        %v519 = vrot.slane %v508, 5
        %vm520 = vcmask 1043459
        %v521 = vsel %vm520, %v519, %v518
        %vm523 = vcmask 125952
        %524 = vst.msk [vmem:[#allocation3] sm:$0xf] %vm523, %v521
        %v525 = vld [vmem:[%s196 + $0xf] sm:$0x1]
        %vm526 = vcmask 122880
        %527 = vst.msk [vmem:[#allocation4] sm:$0x1] %vm526, %v525
        // Predicated region
        $region45: #{tpu_custom_call.1} parent=27 // pred_check
          %p528 = pneg %p224
        $region46: #{tpu_custom_call.1} parent=27 // pred_check_branch
          %530 = sbr.rel (%p528) target = $region48
        $region47: #{tpu_custom_call.1} parent=27 // pred_region
          %v531 = vld [vmem:[#allocation2] sm:$0xff]
          %v532 = vsel %vm498, %v531, 0.0
          %533 = vadd.xlane.f32.xlu0 %v532
          %v534 = vpop.xlane.xlu0 %533
          %v535 = vrot.slane %v534, 4
          %v536 = vadd.f32 %v534, %v535
          %v537 = vrot.slane %v536, 2
          %v538 = vadd.f32 %v536, %v537
          %v539 = vrot.slane %v538, 1
          %v540 = vadd.f32 %v538, %v539
          %s541 = vtos %v540
          %s542 = smul.f32 %s541, 0.0009765625
          %v543 = vstv %s542
          %544 = vst [vmem:[%s221] sm:$0xff] %v543
        $region48: #{tpu_custom_call.1} parent=27 // pred_fallthru
          _
        %s545 = sand.u32 %s98, 1
        %s546 = scalar_lea.sflag [#allocation7], %s545
        %s547 = sand.u32 %s98, 1
        %s548 = smul.addr %s547, 8
        %s549 = scalar_lea.vmem [#allocation10], %s548
        // Predicated region
        $region49: #{tpu_custom_call.1} parent=27 // pred_check
          %p550 = pneg %p108
        $region50: #{tpu_custom_call.1} parent=27 // pred_check_branch
          %552 = sbr.rel (%p550) target = $region52
        $region51: #{tpu_custom_call.1} parent=27 // pred_region
          %s554 = ssub.s32 128, 128
          %555 = vsyncadd %s546, %s554
          %s556 = smul.addr %s26, 128
          %s557 = scalar_lea.hbm %s2, %s556
          %s559 = sshll.u32 %s549, 4
          %s560 = int_to_ptr.vmem [resolvable:$true] %s559
          %562 = dma.vmem_to_hbm [thread:$0]  %s560, 128, %s557, %s546
        $region52: #{tpu_custom_call.1} parent=27 // pred_fallthru
          _
      $region28: #{tpu_custom_call.1} parent=5 // pred_fallthru
        _
      %p563 = scmp.le.s32.totalorder 2, %s17
      // Predicated region
      $region53: #{tpu_custom_call.1} parent=5 // pred_check
        %p564 = pneg %p563
      $region54: #{tpu_custom_call.1} parent=5 // pred_check_branch
        %566 = sbr.rel (%p564) target = $region56
      $region55: #{tpu_custom_call.1} parent=5 // pred_region
        %s567 = ssub.s32 %s17, 2
        // Predicated region
        $region57: #{tpu_custom_call.1} parent=55 // pred_check
          %p568 = pneg %p114
        $region58: #{tpu_custom_call.1} parent=55 // pred_check_branch
          %570 = sbr.rel (%p568) target = $region60
        $region59: #{tpu_custom_call.1} parent=55 // pred_region
          %s571 = sand.u32 %s99, 1
          %s572 = scalar_lea.sflag [#allocation7], %s571
          %s573 = sand.u32 %s99, 1
          %s574 = smul.addr %s573, 8
          %s575 = scalar_lea.vmem [#allocation10], %s574
          %576 = dma.done %s572, 128
        $region60: #{tpu_custom_call.1} parent=55 // pred_fallthru
          _
      $region56: #{tpu_custom_call.1} parent=5 // pred_fallthru
        _
    $region6: #{tpu_custom_call.1} parent=1 // loop_footer
      %s21 = sadd.s32 1, %s17
    $region7: #{tpu_custom_call.1} parent=1 // loop_footer_branch
      %16 = sbr.rel target = $region3
    $region8: #{tpu_custom_call.1} parent=1 // loop_exit
      _
    %577 = vsyncpa [#allocation6], 1
    %s578 = scalar_lea.sflag [#allocation6], 1
    %579 = vsyncpa %s578, 1
    %580 = vsyncpa [#allocation9], 1
    %s581 = scalar_lea.sflag [#allocation9], 1
    %582 = vsyncpa %s581, 1
    %583 = vsyncpa [#allocation7], 1
    %s584 = scalar_lea.sflag [#allocation7], 1
    %585 = vsyncpa %s584, 1

</llo_original>
